<compile_context>
chip_gen: v7x
topology: tpu7x:2x2x1
jax: 0.10.0
libtpu: 0.0.40
codegen_flags: <defaults>
</compile_context>

<pallas_src>
import jax
import jax.numpy as jnp
from jax import lax
from jax.experimental import pallas as pl
from jax.experimental.pallas import tpu as pltpu

# Hyperparameters (small, consistent with the module defaults scaled down)
CHAR_VOCAB = 32
CHAR_EMB_DIM = 16
OUTPUT_DIM = 32
KERNEL_SIZES = (2, 3, 4)
NUM_FILTERS = 64


def _pad_lr(k):
    # mirrors the PyTorch padding choice: k//2 if odd else (k//2 - 1, k//2)
    if k % 2 == 1:
        return k // 2, k // 2
    return k // 2 - 1, k // 2


L_PAD = max(_pad_lr(k)[0] for k in KERNEL_SIZES)          # 1
R_PAD = max(_pad_lr(k)[1] for k in KERNEL_SIZES)          # 2
NUM_SHIFTS = L_PAD + R_PAD + 1                            # 4 distinct taps
K_PACK = NUM_SHIFTS * CHAR_VOCAB                          # 128 (MXU-friendly K)
F_PACK = NUM_FILTERS * len(KERNEL_SIZES)                  # 192


def _round_up(x, m):
    return (x + m - 1) // m * m


def char_cnn_kernel(tgt_ref, wconv_ref, bconv_ref, wfc_ref, bfc_ref, out_ref):
    # tgt_ref: (TN, C, NUM_SHIFTS) int32, tgt[n,c,s] = char_id[n, c+s-L_PAD] + s*V
    #          (already padded/shifted in the wrapper -> no in-kernel relayout).
    # Small (1,1,128) iota; the per-compare broadcast never materializes a
    # (TN, C, 128) int32 tensor.
    lane = lax.broadcasted_iota(jnp.int32, (1, 1, K_PACK), 2)

    # Packed one-hot: lane l in [0, 4V) means "shift s = l // V, vocab v = l % V".
    # Every target s lands in its own V-lane block (ids are clamped to [0, V)),
    # so OR-ing the four compares builds the packed one-hot directly.
    hot = None
    for s in range(NUM_SHIFTS):
        hit = tgt_ref[:, :, s:s + 1] == lane              # (TN,C,1) vs (1,1,128)
        hot = hit if hot is None else jnp.logical_or(hot, hit)
    onehot = hot.astype(jnp.bfloat16)                     # (TN, C, 4V)

    # Fused conv: all taps of k=2/3/4 in one (TN*C, 128) x (128, 192) matmul.
    # Padding char-id 0 selects the zeroed embedding row (padding_idx=0), so it
    # contributes exactly 0 -- identical to Conv1d zero padding.
    conv = lax.dot_general(onehot, wconv_ref[...],
                           dimension_numbers=(((2,), (0,)), ((), ())),
                           preferred_element_type=jnp.float32)    # (TN, C, 3F)

    # Pool BEFORE bias+ReLU (ReLU(x+b) is monotone in x, b constant over chars):
    # bias/ReLU now run on (TN, 3F) instead of (TN, C, 3F).
    feat = jnp.max(conv, axis=1)                                  # (TN, 3F)
    feat = jnp.maximum(feat + bconv_ref[...], 0.0)

    # TODO(synk): nn.Dropout(0.25) omitted -- inference/eval semantics (identity).
    # FC kept in f32 (tiny matmul; tighter numerics). Output lanes padded to 128
    # in the wrapper so this store is lane-dense (no masked partial vst).
    out = jnp.dot(feat, wfc_ref[...],
                  preferred_element_type=jnp.float32) + bfc_ref[...]
    out_ref[...] = out.astype(out_ref.dtype)


def _pack_conv_weights(params):
    """Fold the embedding table into the conv weights and pack every
    (kernel-width, tap) pair into a single (NUM_SHIFTS*V, 3F) matrix."""
    table = params["emb"]                                         # (V, E)
    V = table.shape[0]
    F = NUM_FILTERS
    w_packed = jnp.zeros((NUM_SHIFTS * V, F_PACK), jnp.float32)
    for kidx, k in enumerate(KERNEL_SIZES):
        pad_l, _ = _pad_lr(k)
        w = params[f"conv{k}_w"]                                  # (F, E, k)
        for tau in range(k):
            s = tau - pad_l + L_PAD                               # shift slot
            folded = table @ w[:, :, tau].T                       # (V, F)
            w_packed = w_packed.at[s * V:(s + 1) * V,
                                   kidx * F:(kidx + 1) * F].set(folded)
    b_packed = jnp.concatenate([params[f"conv{k}_b"] for k in KERNEL_SIZES])
    return w_packed.astype(jnp.bfloat16), b_packed.reshape(1, -1)


def _auto_tile_and_vmem(C):
    """Pick tile_n and vmem_limit from the actual VMEM capacity.

    Per-row VMEM (bytes), with C rounded to a sublane multiple; lane padding
    is what dominates (the 4-wide im2col targets occupy a full 128-lane tile):
      im2col targets int32, double-buffered : 2 * C * 128 * 4
      bf16 one-hot (C, 128)                 :     C * 128 * 2
      f32 conv intermediate (C, 192->256)   :     C * 256 * 4
      padded f32 output, double-buffered    : 2 * 128 * 4
      slack (masks / spills / epilogue)     : 8 KiB
    """
    try:
        vmem_cap = int(pltpu.get_tpu_info().vmem_capacity_bytes)
    except Exception:
        vmem_cap = 64 * 1024 * 1024            # conservative (v7x-sized) fallback
    vmem_cap = min(vmem_cap, 128 * 1024 * 1024)

    c_sub = _round_up(C, 8)
    per_row = (2 * c_sub * 128 * 4
               + c_sub * 128 * 2
               + c_sub * 256 * 4
               + 2 * 128 * 4
               + 8 * 1024)
    budget = vmem_cap * 5 // 8                 # leave headroom below physical
    tile = 256
    for cand in (1536, 1024, 768, 512, 384, 256):
        if cand * per_row <= budget:
            tile = cand
            break
    vmem_limit = max(32 * 1024 * 1024,
                     min(budget + 24 * 1024 * 1024, vmem_cap - 8 * 1024 * 1024))
    return tile, int(vmem_limit)


def char_cnn_forward(char_ids, params, *, tile_n=None):
    B, S, C = char_ids.shape
    N = B * S
    D = params["fc_w"].shape[0]
    d_pad = _round_up(D, 128)                 # lane-dense output block

    auto_tile, vmem_limit = _auto_tile_and_vmem(C)
    tile_gen = _round_up(tile_n, 8) if tile_n is not None else auto_tile

    # Clamp to problem size, then guarantee >= 2 grid steps (when possible) so
    # dimension_semantics=("parallel",) shards across both TensorCores on v7x.
    tile = min(tile_gen, _round_up(N, 8))
    if _round_up(N, tile) // tile < 2 and N > 8:
        tile = _round_up((N + 1) // 2, 8)
    n_pad = _round_up(N, tile)

    # --- wrapper-side im2col: no lane->sublane relayout inside the kernel ---
    ids = char_ids.reshape(N, C).astype(jnp.int32)
    ids = jnp.clip(ids, 0, CHAR_VOCAB - 1)    # guard the one-hot shift-block trick
    # Pad rows up to a multiple of `tile` with char id 0 (sliced off after),
    # and pad the char axis left/right with id 0 (zero embedding row => exact
    # Conv1d zero-padding semantics).
    ids = jnp.pad(ids, ((0, n_pad - N), (L_PAD, R_PAD)))          # (n_pad, C+3)
    # tgt[n, c, s] = ids_padded[n, c+s] + s*V  -> (n_pad, C, NUM_SHIFTS) int32
    tgt = jnp.stack([ids[:, s:s + C] + s * CHAR_VOCAB
                     for s in range(NUM_SHIFTS)], axis=2)

    w_conv, b_conv = _pack_conv_weights(params)                   # (128,192),(1,192)
    # FC padded to d_pad lanes with zero weights/bias; f32 for tight numerics.
    w_fc = jnp.zeros((F_PACK, d_pad), jnp.float32).at[:, :D].set(
        params["fc_w"].T.astype(jnp.float32))
    b_fc = jnp.zeros((1, d_pad), jnp.float32).at[:, :D].set(
        params["fc_b"].astype(jnp.float32))

    def full_spec(arr):
        return pl.BlockSpec(arr.shape, lambda i, nd=arr.ndim: (0,) * nd)

    out = pl.pallas_call(
        char_cnn_kernel,
        out_shape=jax.ShapeDtypeStruct((n_pad, d_pad), jnp.float32),
        grid=(n_pad // tile,),
        in_specs=[
            pl.BlockSpec((tile, C, NUM_SHIFTS), lambda i: (i, 0, 0)),
            full_spec(w_conv), full_spec(b_conv),
            full_spec(w_fc), full_spec(b_fc),
        ],
        out_specs=pl.BlockSpec((tile, d_pad), lambda i: (i, 0)),
        compiler_params=pltpu.CompilerParams(
            dimension_semantics=("parallel",),   # shards grid across TCs (v7x)
            vmem_limit_bytes=vmem_limit),        # gen-aware, < physical VMEM
    )(tgt, w_conv, b_conv, w_fc, b_fc)
    return out[:N, :D].reshape(B, S, D)


def init_params(key):
    ks = jax.random.split(key, 8)
    emb = jax.random.normal(ks[0], (CHAR_VOCAB, CHAR_EMB_DIM), jnp.float32) * 0.1
    emb = emb.at[0].set(0.0)  # padding_idx = 0
    params = {"emb": emb}
    for i, k in enumerate(KERNEL_SIZES):
        params[f"conv{k}_w"] = jax.random.normal(
            ks[1 + i], (NUM_FILTERS, CHAR_EMB_DIM, k), jnp.float32) * 0.1
        params[f"conv{k}_b"] = jax.random.normal(
            ks[4 + i], (NUM_FILTERS,), jnp.float32) * 0.1
    params["fc_w"] = jax.random.normal(
        ks[7], (OUTPUT_DIM, NUM_FILTERS * len(KERNEL_SIZES)), jnp.float32) * 0.1
    params["fc_b"] = jnp.zeros((OUTPUT_DIM,), jnp.float32)
    return params


def char_cnn_reference(char_ids, params):
    """Pure-JAX f32 reference mirroring the PyTorch forward (eval mode)."""
    B, S, C = char_ids.shape
    ids = char_ids.reshape(-1, C)
    emb = params["emb"][ids]                                      # (N, C, E)
    feats = []
    for k in KERNEL_SIZES:
        pad_l, pad_r = _pad_lr(k)
        x = jnp.pad(emb, ((0, 0), (pad_l, pad_r), (0, 0)))
        w = params[f"conv{k}_w"]                                  # (F, E, k)
        conv = sum(jnp.einsum("nce,fe->ncf", x[:, t:t + C, :], w[:, :, t])
                   for t in range(k)) + params[f"conv{k}_b"]
        feats.append(jnp.max(jax.nn.relu(conv), axis=1))
    feat = jnp.concatenate(feats, axis=1)
    out = feat @ params["fc_w"].T + params["fc_b"]
    return out.reshape(B, S, -1)


if __name__ == "__main__":
    key = jax.random.PRNGKey(0)
    pkey, dkey, dkey2 = jax.random.split(key, 3)
    params = init_params(pkey)

    # (batch, max_subwords, max_chars_per_subword)
    B, S, C = 2, 8, 16
    char_ids = jax.random.randint(dkey, (B, S, C), 0, CHAR_VOCAB, dtype=jnp.int32)

    out = jax.block_until_ready(char_cnn_forward(char_ids, params))
    ref = char_cnn_reference(char_ids, params)
    assert out.shape == (B, S, OUTPUT_DIM), out.shape
    # bf16 conv-weight operands (f32 accumulation) => loosened tolerance vs f32 ref.
    assert jnp.allclose(out, ref, atol=2e-2, rtol=2e-2), \
        float(jnp.abs(out - ref).max())

    # Ragged case exercising the row-padded tail (N = 15, not a multiple of 8).
    char_ids2 = jax.random.randint(dkey2, (3, 5, C), 0, CHAR_VOCAB, dtype=jnp.int32)
    out2 = jax.block_until_ready(char_cnn_forward(char_ids2, params))
    ref2 = char_cnn_reference(char_ids2, params)
    assert out2.shape == (3, 5, OUTPUT_DIM), out2.shape
    assert jnp.allclose(out2, ref2, atol=2e-2, rtol=2e-2), \
        float(jnp.abs(out2 - ref2).max())

    print("KERNEL_OK")
</pallas_src>

<mosaic_0001>
module attributes {stable_mosaic.version = 11 : i64} {
  func.func @char_cnn_kernel(%arg0: i32, %arg1: memref<8x16x4xi32, #tpu.memory_space<vmem>>, %arg2: memref<128x192xbf16, #tpu.memory_space<vmem>>, %arg3: memref<1x192xf32, #tpu.memory_space<vmem>>, %arg4: memref<192x128xf32, #tpu.memory_space<vmem>>, %arg5: memref<1x128xf32, #tpu.memory_space<vmem>>, %arg6: memref<8x128xf32, #tpu.memory_space<vmem>>) attributes {dimension_semantics = [#tpu.dimension_semantics<parallel>], iteration_bounds = array<i64: 2>, scalar_prefetch = 0 : i64, scratch_operands = 0 : i64, tpu.core_type = #tpu.core_type<tc>, window_params = [{transform_indices = @transform_0, window_bounds = array<i64: 8, 16, 4>}, {pipeline_mode = #tpu.pipeline_mode<synchronous>, transform_indices = @transform_1, window_bounds = array<i64: 128, 192>}, {pipeline_mode = #tpu.pipeline_mode<synchronous>, transform_indices = @transform_2, window_bounds = array<i64: 1, 192>}, {pipeline_mode = #tpu.pipeline_mode<synchronous>, transform_indices = @transform_3, window_bounds = array<i64: 192, 128>}, {pipeline_mode = #tpu.pipeline_mode<synchronous>, transform_indices = @transform_4, window_bounds = array<i64: 1, 128>}, {transform_indices = @transform_5, window_bounds = array<i64: 8, 128>}]} {
    %0 = tpu.iota {dimensions = array<i32: 2>} : vector<1x1x128xi32>
    %c0 = arith.constant 0 : index
    %c0_0 = arith.constant 0 : index
    %c0_1 = arith.constant 0 : index
    %1 = vector.load %arg1[%c0, %c0_0, %c0_1] : memref<8x16x4xi32, #tpu.memory_space<vmem>>, vector<8x16x1xi32>
    %2 = vector.broadcast %1 : vector<8x16x1xi32> to vector<8x16x128xi32>
    %3 = vector.broadcast %0 : vector<1x1x128xi32> to vector<8x16x128xi32>
    %4 = arith.cmpi eq, %2, %3 : vector<8x16x128xi32>
    %c0_2 = arith.constant 0 : index
    %c0_3 = arith.constant 0 : index
    %c1 = arith.constant 1 : index
    %5 = vector.load %arg1[%c0_2, %c0_3, %c1] : memref<8x16x4xi32, #tpu.memory_space<vmem>>, vector<8x16x1xi32>
    %6 = vector.broadcast %5 : vector<8x16x1xi32> to vector<8x16x128xi32>
    %7 = vector.broadcast %0 : vector<1x1x128xi32> to vector<8x16x128xi32>
    %8 = arith.cmpi eq, %6, %7 : vector<8x16x128xi32>
    %9 = arith.ori %4, %8 : vector<8x16x128xi1>
    %c0_4 = arith.constant 0 : index
    %c0_5 = arith.constant 0 : index
    %c2 = arith.constant 2 : index
    %10 = vector.load %arg1[%c0_4, %c0_5, %c2] : memref<8x16x4xi32, #tpu.memory_space<vmem>>, vector<8x16x1xi32>
    %11 = vector.broadcast %10 : vector<8x16x1xi32> to vector<8x16x128xi32>
    %12 = vector.broadcast %0 : vector<1x1x128xi32> to vector<8x16x128xi32>
    %13 = arith.cmpi eq, %11, %12 : vector<8x16x128xi32>
    %14 = arith.ori %9, %13 : vector<8x16x128xi1>
    %c0_6 = arith.constant 0 : index
    %c0_7 = arith.constant 0 : index
    %c3 = arith.constant 3 : index
    %15 = vector.load %arg1[%c0_6, %c0_7, %c3] : memref<8x16x4xi32, #tpu.memory_space<vmem>>, vector<8x16x1xi32>
    %16 = vector.broadcast %15 : vector<8x16x1xi32> to vector<8x16x128xi32>
    %17 = vector.broadcast %0 : vector<1x1x128xi32> to vector<8x16x128xi32>
    %18 = arith.cmpi eq, %16, %17 : vector<8x16x128xi32>
    %19 = arith.ori %14, %18 : vector<8x16x128xi1>
    %20 = arith.extui %19 : vector<8x16x128xi1> to vector<8x16x128xi32>
    %21 = arith.sitofp %20 : vector<8x16x128xi32> to vector<8x16x128xf32>
    %22 = arith.truncf %21 : vector<8x16x128xf32> to vector<8x16x128xbf16>
    %c0_8 = arith.constant 0 : index
    %c0_9 = arith.constant 0 : index
    %23 = vector.load %arg2[%c0_8, %c0_9] : memref<128x192xbf16, #tpu.memory_space<vmem>>, vector<128x192xbf16>
    %cst = arith.constant dense<0.000000e+00> : vector<8x16x192xf32>
    %24 = tpu.matmul %22, %23, %cst {dimension_numbers = #tpu.dot_dimension_numbers<[2], [0], [0, 1], [1], [0, 0, 0, 1, 1, 1], [], []>} : vector<8x16x128xbf16>, vector<128x192xbf16>, vector<8x16x192xf32> -> vector<8x16x192xf32>
    %cst_10 = arith.constant dense<0xFF800000> : vector<8x192xf32>
    %25 = vector.multi_reduction <maximumf>, %24, %cst_10 [1] : vector<8x16x192xf32> to vector<8x192xf32>
    %c0_11 = arith.constant 0 : index
    %c0_12 = arith.constant 0 : index
    %26 = vector.load %arg3[%c0_11, %c0_12] : memref<1x192xf32, #tpu.memory_space<vmem>>, vector<1x192xf32>
    %27 = vector.broadcast %26 : vector<1x192xf32> to vector<8x192xf32>
    %28 = arith.addf %25, %27 : vector<8x192xf32>
    %cst_13 = arith.constant 0.000000e+00 : f32
    %29 = vector.broadcast %cst_13 : f32 to vector<8x192xf32>
    %30 = arith.maximumf %28, %29 : vector<8x192xf32>
    %c0_14 = arith.constant 0 : index
    %c0_15 = arith.constant 0 : index
    %31 = vector.load %arg4[%c0_14, %c0_15] : memref<192x128xf32, #tpu.memory_space<vmem>>, vector<192x128xf32>
    %cst_16 = arith.constant dense<0.000000e+00> : vector<8x128xf32>
    %32 = tpu.matmul %30, %31, %cst_16 {dimension_numbers = #tpu.dot_dimension_numbers<[1], [0], [0], [1], [0, 0, 1, 1], [], []>} : vector<8x192xf32>, vector<192x128xf32>, vector<8x128xf32> -> vector<8x128xf32>
    %c0_17 = arith.constant 0 : index
    %c0_18 = arith.constant 0 : index
    %33 = vector.load %arg5[%c0_17, %c0_18] : memref<1x128xf32, #tpu.memory_space<vmem>>, vector<1x128xf32>
    %34 = vector.broadcast %33 : vector<1x128xf32> to vector<8x128xf32>
    %35 = arith.addf %32, %34 : vector<8x128xf32>
    %c0_19 = arith.constant 0 : index
    %c0_20 = arith.constant 0 : index
    %36 = vector.load %arg6[%c0_19, %c0_20] : memref<8x128xf32, #tpu.memory_space<vmem>>, vector<8x128xf32>
    tpu.vector_store %arg6[%c0_19, %c0_20], %35 {strides = array<i32>} : memref<8x128xf32, #tpu.memory_space<vmem>>, vector<8x128xf32>,
    return
  }
  func.func @transform_0(%arg0: i32) -> (i32, i32, i32) {
    %c0_i32 = arith.constant 0 : i32
    %c0_i32_0 = arith.constant 0 : i32
    %c0_i32_1 = arith.constant 0 : i32
    return %arg0, %c0_i32, %c0_i32_0 : i32, i32, i32
  }
  func.func @transform_1(%arg0: i32) -> (i32, i32) {
    %c0_i32 = arith.constant 0 : i32
    %c0_i32_0 = arith.constant 0 : i32
    %c0_i32_1 = arith.constant 0 : i32
    return %c0_i32, %c0_i32_0 : i32, i32
  }
  func.func @transform_2(%arg0: i32) -> (i32, i32) {
    %c0_i32 = arith.constant 0 : i32
    %c0_i32_0 = arith.constant 0 : i32
    %c0_i32_1 = arith.constant 0 : i32
    return %c0_i32, %c0_i32_0 : i32, i32
  }
  func.func @transform_3(%arg0: i32) -> (i32, i32) {
    %c0_i32 = arith.constant 0 : i32
    %c0_i32_0 = arith.constant 0 : i32
    %c0_i32_1 = arith.constant 0 : i32
    return %c0_i32, %c0_i32_0 : i32, i32
  }
  func.func @transform_4(%arg0: i32) -> (i32, i32) {
    %c0_i32 = arith.constant 0 : i32
    %c0_i32_0 = arith.constant 0 : i32
    %c0_i32_1 = arith.constant 0 : i32
    return %c0_i32, %c0_i32_0 : i32, i32
  }
  func.func @transform_5(%arg0: i32) -> (i32, i32) {
    %c0_i32 = arith.constant 0 : i32
    %c0_i32_0 = arith.constant 0 : i32
    return %arg0, %c0_i32 : i32, i32
  }
}

</mosaic_0001>

<llo_original>
// kernel: tpu_custom_call.1
$region0: #{tpu_custom_call.1}
  #allocation0 [shape = 'u32[]', space=smem, size = 0x4, offset = 0x4, fixed_abs, tag = 'smem constant byte address 0x4 - core index']
  #allocation1 [shape = 'u32[144,128]{1,0:T(1,128)}', space=vmem, size = 0x12000, scoped, tag = 'internal scratch']
  %s0 = inlined_call_operand.vmem [shape: s32[16,16,4], index: 0, kind: input, shape index: {}]
  %s1 = inlined_call_operand.vmem [shape: bf16[128,192], index: 1, kind: input, shape index: {}]
  %s2 = inlined_call_operand.vmem [shape: f32[1,192], index: 2, kind: input, shape index: {}]
  %s3 = inlined_call_operand.vmem [shape: f32[192,128], index: 3, kind: input, shape index: {}]
  %s4 = inlined_call_operand.vmem [shape: f32[1,128], index: 4, kind: input, shape index: {}]
  %s5 = inlined_call_operand.hbm [shape: f32[16,128], index: 5, kind: output, shape index: {}]
  %s6 = sld [smem:[#allocation0]]
  $region53: #{tpu_custom_call.1} parent=0
    _
  %s8 = ssub.s32 1, %s6
  %s9 = scalar_select 0, %s8, %s6
  $region1: #{tpu_custom_call.1} parent=0
    #allocation2 [shape = 'u8[8192]{0}', space=vmem, size = 0x2000, scoped, tag = 'output window, operand 0']
    #allocation3 [shape = 's32[2]{0}', space=sflag, size = 0x8, scoped, tag = 'scoped memory for tpu_custom_call.1']
    %10 = vsyncpa [#allocation3], 0
    %s11 = scalar_lea.sflag [#allocation3], 1
    %12 = vsyncpa %s11, 0
    loop: start=0, step=1, limit=4
    $region2: #{tpu_custom_call.1} parent=1 // loop_pre_header
      _
    $region3: #{tpu_custom_call.1} parent=1 // loop_header
      %s14 = sphi 0, %s18
      %p15 = scmp.ge.s32.totalorder %s14, 4
      %s24 = sphi 0, %s26
      %s27 = sphi 0, %s24
      %s28 = sphi 0, %s27
      %s44 = sphi 0, %s28
      %s48 = sphi 0, %s48
      %s50 = sphi 0, %s48
      %s51 = sphi 0, %s50
      %s65 = sphi 0, %s51
      %s69 = sphi 0, %s69
      %s71 = sphi 0, %s69
      %s72 = sphi 0, %s71
      %s86 = sphi 0, %s72
      %s90 = sphi 0, %s90
      %s92 = sphi 0, %s90
      %s93 = sphi 0, %s92
      %s107 = sphi 0, %s93
      %s111 = sphi 0, %s111
      %s113 = sphi 0, %s111
      %s114 = sphi 0, %s113
      %s128 = sphi 0, %s114
      %s134 = sphi 0, %s136
      %s137 = sphi 0, %s134
      %s138 = sphi 0, %s137
      %s154 = sphi 0, %s138
    $region4: #{tpu_custom_call.1} parent=1 // loop_header_branch
      %17 = sbr.rel (%p15) target = $region8
    $region5: #{tpu_custom_call.1} parent=1 // loop_body
      %s19 = ssub.s32 %s14, 1
      %s20 = ssub.s32 %s14, 2
      %s21 = sadd.s32 %s14, 1
      %s22 = ssub.s32 %s14, %s21
      %p23 = scmp.eq.s32.totalorder %s22, 0
      %s25 = sadd.s32 %s24, 1
      %s26 = scalar_select %p23, %s24, %s25
      %p29 = pneg %p23
      %p30 = scmp.eq.s32.totalorder %s14, 1
      %p31 = por %p29, %p30
      %p32 = scmp.ne.s32.totalorder %s24, %s27
      %p33 = scmp.eq.s32.totalorder %s14, 0
      %p34 = por %p32, %p33
      %p35 = scmp.ne.s32.totalorder %s24, %s27
      %p36 = scmp.eq.s32.totalorder %s19, 1
      %p37 = por %p35, %p36
      %p38 = scmp.ne.s32.totalorder %s27, %s28
      %p39 = scmp.eq.s32.totalorder %s19, 0
      %p40 = por %p38, %p39
      %p41 = scmp.ne.s32.totalorder %s27, %s28
      %p42 = scmp.eq.s32.totalorder %s20, 1
      %p43 = por %p41, %p42
      %p45 = scmp.ne.s32.totalorder %s28, %s44
      %p46 = scmp.eq.s32.totalorder %s20, 0
      %p47 = por %p45, %p46
      %s49 = sadd.s32 %s48, 1
      %p52 = scmp.eq.s32.totalorder %s14, 1
      %p53 = scmp.ne.s32.totalorder %s48, %s50
      %p54 = scmp.eq.s32.totalorder %s14, 0
      %p55 = por %p53, %p54
      %p56 = scmp.ne.s32.totalorder %s48, %s50
      %p57 = scmp.eq.s32.totalorder %s19, 1
      %p58 = por %p56, %p57
      %p59 = scmp.ne.s32.totalorder %s50, %s51
      %p60 = scmp.eq.s32.totalorder %s19, 0
      %p61 = por %p59, %p60
      %p62 = scmp.ne.s32.totalorder %s50, %s51
      %p63 = scmp.eq.s32.totalorder %s20, 1
      %p64 = por %p62, %p63
      %p66 = scmp.ne.s32.totalorder %s51, %s65
      %p67 = scmp.eq.s32.totalorder %s20, 0
      %p68 = por %p66, %p67
      %s70 = sadd.s32 %s69, 1
      %p73 = scmp.eq.s32.totalorder %s14, 1
      %p74 = scmp.ne.s32.totalorder %s69, %s71
      %p75 = scmp.eq.s32.totalorder %s14, 0
      %p76 = por %p74, %p75
      %p77 = scmp.ne.s32.totalorder %s69, %s71
      %p78 = scmp.eq.s32.totalorder %s19, 1
      %p79 = por %p77, %p78
      %p80 = scmp.ne.s32.totalorder %s71, %s72
      %p81 = scmp.eq.s32.totalorder %s19, 0
      %p82 = por %p80, %p81
      %p83 = scmp.ne.s32.totalorder %s71, %s72
      %p84 = scmp.eq.s32.totalorder %s20, 1
      %p85 = por %p83, %p84
      %p87 = scmp.ne.s32.totalorder %s72, %s86
      %p88 = scmp.eq.s32.totalorder %s20, 0
      %p89 = por %p87, %p88
      %s91 = sadd.s32 %s90, 1
      %p94 = scmp.eq.s32.totalorder %s14, 1
      %p95 = scmp.ne.s32.totalorder %s90, %s92
      %p96 = scmp.eq.s32.totalorder %s14, 0
      %p97 = por %p95, %p96
      %p98 = scmp.ne.s32.totalorder %s90, %s92
      %p99 = scmp.eq.s32.totalorder %s19, 1
      %p100 = por %p98, %p99
      %p101 = scmp.ne.s32.totalorder %s92, %s93
      %p102 = scmp.eq.s32.totalorder %s19, 0
      %p103 = por %p101, %p102
      %p104 = scmp.ne.s32.totalorder %s92, %s93
      %p105 = scmp.eq.s32.totalorder %s20, 1
      %p106 = por %p104, %p105
      %p108 = scmp.ne.s32.totalorder %s93, %s107
      %p109 = scmp.eq.s32.totalorder %s20, 0
      %p110 = por %p108, %p109
      %s112 = sadd.s32 %s111, 1
      %p115 = scmp.eq.s32.totalorder %s14, 1
      %p116 = scmp.ne.s32.totalorder %s111, %s113
      %p117 = scmp.eq.s32.totalorder %s14, 0
      %p118 = por %p116, %p117
      %p119 = scmp.ne.s32.totalorder %s111, %s113
      %p120 = scmp.eq.s32.totalorder %s19, 1
      %p121 = por %p119, %p120
      %p122 = scmp.ne.s32.totalorder %s113, %s114
      %p123 = scmp.eq.s32.totalorder %s19, 0
      %p124 = por %p122, %p123
      %p125 = scmp.ne.s32.totalorder %s113, %s114
      %p126 = scmp.eq.s32.totalorder %s20, 1
      %p127 = por %p125, %p126
      %p129 = scmp.ne.s32.totalorder %s114, %s128
      %p130 = scmp.eq.s32.totalorder %s20, 0
      %p131 = por %p129, %p130
      %s132 = ssub.s32 %s14, %s21
      %p133 = scmp.eq.s32.totalorder %s132, 0
      %s135 = sadd.s32 %s134, 1
      %s136 = scalar_select %p133, %s134, %s135
      %p139 = pneg %p133
      %p140 = scmp.eq.s32.totalorder %s14, 1
      %p141 = por %p139, %p140
      %p142 = scmp.ne.s32.totalorder %s134, %s137
      %p143 = scmp.eq.s32.totalorder %s14, 0
      %p144 = por %p142, %p143
      %p145 = scmp.ne.s32.totalorder %s134, %s137
      %p146 = scmp.eq.s32.totalorder %s19, 1
      %p147 = por %p145, %p146
      %p148 = scmp.ne.s32.totalorder %s137, %s138
      %p149 = scmp.eq.s32.totalorder %s19, 0
      %p150 = por %p148, %p149
      %p151 = scmp.ne.s32.totalorder %s137, %s138
      %p152 = scmp.eq.s32.totalorder %s20, 1
      %p153 = por %p151, %p152
      %p155 = scmp.ne.s32.totalorder %s138, %s154
      %p156 = scmp.eq.s32.totalorder %s20, 0
      %p157 = por %p155, %p156
      %p158 = scmp.le.s32.totalorder 1, %s14
      %p159 = scmp.lt.s32.totalorder %s14, 3
      %p160 = pnand %p158, %p159
      %p161 = pneg %p160
      // Predicated region
      $region9: #{tpu_custom_call.1} parent=5 // pred_check
        _
      $region10: #{tpu_custom_call.1} parent=5 // pred_check_branch
        %163 = sbr.rel (%p160) target = $region12
      $region11: #{tpu_custom_call.1} parent=5 // pred_region
        %s164 = ssub.s32 %s14, 1
        // Predicated region
        $region13: #{tpu_custom_call.1} parent=11 // pred_check
          %p165 = pneg %p61
        $region14: #{tpu_custom_call.1} parent=11 // pred_check_branch
          %167 = sbr.rel (%p165) target = $region16
        $region15: #{tpu_custom_call.1} parent=11 // pred_region
          _
        $region16: #{tpu_custom_call.1} parent=11 // pred_fallthru
          _
        // Predicated region
        $region17: #{tpu_custom_call.1} parent=11 // pred_check
          %p168 = pneg %p82
        $region18: #{tpu_custom_call.1} parent=11 // pred_check_branch
          %170 = sbr.rel (%p168) target = $region20
        $region19: #{tpu_custom_call.1} parent=11 // pred_region
          _
        $region20: #{tpu_custom_call.1} parent=11 // pred_fallthru
          _
        // Predicated region
        $region21: #{tpu_custom_call.1} parent=11 // pred_check
          %p171 = pneg %p103
        $region22: #{tpu_custom_call.1} parent=11 // pred_check_branch
          %173 = sbr.rel (%p171) target = $region24
        $region23: #{tpu_custom_call.1} parent=11 // pred_region
          _
        $region24: #{tpu_custom_call.1} parent=11 // pred_fallthru
          _
        // Predicated region
        $region25: #{tpu_custom_call.1} parent=11 // pred_check
          %p174 = pneg %p124
        $region26: #{tpu_custom_call.1} parent=11 // pred_check_branch
          %176 = sbr.rel (%p174) target = $region28
        $region27: #{tpu_custom_call.1} parent=11 // pred_region
          _
        $region28: #{tpu_custom_call.1} parent=11 // pred_fallthru
          _
      $region12: #{tpu_custom_call.1} parent=5 // pred_fallthru
        _
      %p177 = scmp.lt.s32.totalorder %s14, 2
      // Predicated region
      $region29: #{tpu_custom_call.1} parent=5 // pred_check
        %p178 = pneg %p177
      $region30: #{tpu_custom_call.1} parent=5 // pred_check_branch
        %180 = sbr.rel (%p178) target = $region32
      $region31: #{tpu_custom_call.1} parent=5 // pred_region
        // Predicated region
        $region33: #{tpu_custom_call.1} parent=31 // pred_check
          %p181 = pneg %p34
        $region34: #{tpu_custom_call.1} parent=31 // pred_check_branch
          %183 = sbr.rel (%p181) target = $region36
        $region35: #{tpu_custom_call.1} parent=31 // pred_region
          %s184 = smul.u32 8, %s14
          %p185 = scmp.lt.s32.totalorder %s184, 15
          %s186 = scalar_select %p185, %s184, 15
          %s187 = smul.addr %s186, 2
          %s188 = smul.addr %s187, 8
          %s189 = scalar_lea.vmem %s0, %s188
          %s190 = smul.u32 8, %s14
        $region36: #{tpu_custom_call.1} parent=31 // pred_fallthru
          _
      $region32: #{tpu_custom_call.1} parent=5 // pred_fallthru
        _
      %p191 = scmp.le.s32.totalorder 1, %s14
      %p192 = scmp.lt.s32.totalorder %s14, 3
      %p193 = pnand %p191, %p192
      %p194 = pneg %p193
      // Predicated region
      $region37: #{tpu_custom_call.1} parent=5 // pred_check
        _
      $region38: #{tpu_custom_call.1} parent=5 // pred_check_branch
        %196 = sbr.rel (%p193) target = $region40
      $region39: #{tpu_custom_call.1} parent=5 // pred_region
        %s197 = ssub.s32 %s14, 1
        %s198 = smul.u32 8, %s19
        %p199 = scmp.lt.s32.totalorder %s198, 15
        %s200 = scalar_select %p199, %s198, 15
        %s201 = smul.addr %s200, 2
        %s202 = smul.addr %s201, 8
        %s203 = scalar_lea.vmem %s0, %s202
        %p204 = pneg %p40
        %p205 = pneg %p37
        %p206 = pneg %p61
        %p207 = pneg %p58
        %p208 = pneg %p82
        %p209 = pneg %p79
        %p210 = pneg %p103
        %p211 = pneg %p100
        %p212 = pneg %p124
        %p213 = pneg %p121
        %p214 = pneg %p150
        %p215 = pneg %p147
        %s216 = sand.u32 %s137, 1
        %s217 = scalar_lea.sflag [#allocation3], %s216
        %s218 = sand.u32 %s137, 1
        %s219 = smul.addr %s218, 8
        %s220 = scalar_lea.vmem [#allocation2], %s219
        %s221 = smul.u32 8, %s19
        %p222 = scmp.lt.s32.totalorder %s221, 15
        %s223 = scalar_select %p222, %s221, 15
        %s224 = smul.addr %s223, 2
        %s225 = smul.addr %s224, 8
        %s226 = scalar_lea.vmem %s0, %s225
        %s227 = smul.u32 8, %s19
        %v229 = vlaneseq
        %v230 = vand.u32 %v229, 127
        %v231 = vld [vmem:[%s226] sm:$0xff]
        %v232 = vld [vmem:[%s226 + $0x8] sm:$0xff]
        %v233 = vld [vmem:[%s226 + $0x10] sm:$0xff]
        %v234 = vld [vmem:[%s226 + $0x18] sm:$0xff]
        %v235 = vld [vmem:[%s226 + $0x20] sm:$0xff]
        %v236 = vld [vmem:[%s226 + $0x28] sm:$0xff]
        %v237 = vld [vmem:[%s226 + $0x30] sm:$0xff]
        %v238 = vld [vmem:[%s226 + $0x38] sm:$0xff]
        %v239 = vld [vmem:[%s226 + $0x40] sm:$0xff]
        %v240 = vld [vmem:[%s226 + $0x48] sm:$0xff]
        %v241 = vld [vmem:[%s226 + $0x50] sm:$0xff]
        %v242 = vld [vmem:[%s226 + $0x58] sm:$0xff]
        %v243 = vld [vmem:[%s226 + $0x60] sm:$0xff]
        %v244 = vld [vmem:[%s226 + $0x68] sm:$0xff]
        %v245 = vld [vmem:[%s226 + $0x70] sm:$0xff]
        %v246 = vld [vmem:[%s226 + $0x78] sm:$0xff]
        %247 = vset.pattern.permute.xlu0 0
        %248 = vperm.xlu0 %247, %v231
        %v249 = vpop.permute.xlu0 %248
        %250 = vset.pattern.permute.xlu0 0
        %251 = vperm.xlu0 %250, %v232
        %v252 = vpop.permute.xlu0 %251
        %253 = vset.pattern.permute.xlu0 0
        %254 = vperm.xlu0 %253, %v233
        %v255 = vpop.permute.xlu0 %254
        %256 = vset.pattern.permute.xlu0 0
        %257 = vperm.xlu0 %256, %v234
        %v258 = vpop.permute.xlu0 %257
        %259 = vset.pattern.permute.xlu0 0
        %260 = vperm.xlu0 %259, %v235
        %v261 = vpop.permute.xlu0 %260
        %262 = vset.pattern.permute.xlu0 0
        %263 = vperm.xlu0 %262, %v236
        %v264 = vpop.permute.xlu0 %263
        %265 = vset.pattern.permute.xlu0 0
        %266 = vperm.xlu0 %265, %v237
        %v267 = vpop.permute.xlu0 %266
        %268 = vset.pattern.permute.xlu0 0
        %269 = vperm.xlu0 %268, %v238
        %v270 = vpop.permute.xlu0 %269
        %271 = vset.pattern.permute.xlu0 0
        %272 = vperm.xlu0 %271, %v239
        %v273 = vpop.permute.xlu0 %272
        %274 = vset.pattern.permute.xlu0 0
        %275 = vperm.xlu0 %274, %v240
        %v276 = vpop.permute.xlu0 %275
        %277 = vset.pattern.permute.xlu0 0
        %278 = vperm.xlu0 %277, %v241
        %v279 = vpop.permute.xlu0 %278
        %280 = vset.pattern.permute.xlu0 0
        %281 = vperm.xlu0 %280, %v242
        %v282 = vpop.permute.xlu0 %281
        %283 = vset.pattern.permute.xlu0 0
        %284 = vperm.xlu0 %283, %v243
        %v285 = vpop.permute.xlu0 %284
        %286 = vset.pattern.permute.xlu0 0
        %287 = vperm.xlu0 %286, %v244
        %v288 = vpop.permute.xlu0 %287
        %289 = vset.pattern.permute.xlu0 0
        %290 = vperm.xlu0 %289, %v245
        %v291 = vpop.permute.xlu0 %290
        %292 = vset.pattern.permute.xlu0 0
        %293 = vperm.xlu0 %292, %v246
        %v294 = vpop.permute.xlu0 %293
        %vm295 = vcmp.eq.s32.totalorder %v249, %v230
        %vm296 = vcmp.eq.s32.totalorder %v252, %v230
        %vm297 = vcmp.eq.s32.totalorder %v255, %v230
        %vm298 = vcmp.eq.s32.totalorder %v258, %v230
        %vm299 = vcmp.eq.s32.totalorder %v261, %v230
        %vm300 = vcmp.eq.s32.totalorder %v264, %v230
        %vm301 = vcmp.eq.s32.totalorder %v267, %v230
        %vm302 = vcmp.eq.s32.totalorder %v270, %v230
        %vm303 = vcmp.eq.s32.totalorder %v273, %v230
        %vm304 = vcmp.eq.s32.totalorder %v276, %v230
        %vm305 = vcmp.eq.s32.totalorder %v279, %v230
        %vm306 = vcmp.eq.s32.totalorder %v282, %v230
        %vm307 = vcmp.eq.s32.totalorder %v285, %v230
        %vm308 = vcmp.eq.s32.totalorder %v288, %v230
        %vm309 = vcmp.eq.s32.totalorder %v291, %v230
        %vm310 = vcmp.eq.s32.totalorder %v294, %v230
        %311 = vset.pattern.permute.xlu0 1
        %312 = vperm.xlu0 %311, %v231
        %v313 = vpop.permute.xlu0 %312
        %314 = vset.pattern.permute.xlu0 1
        %315 = vperm.xlu0 %314, %v232
        %v316 = vpop.permute.xlu0 %315
        %317 = vset.pattern.permute.xlu0 1
        %318 = vperm.xlu0 %317, %v233
        %v319 = vpop.permute.xlu0 %318
        %320 = vset.pattern.permute.xlu0 1
        %321 = vperm.xlu0 %320, %v234
        %v322 = vpop.permute.xlu0 %321
        %323 = vset.pattern.permute.xlu0 1
        %324 = vperm.xlu0 %323, %v235
        %v325 = vpop.permute.xlu0 %324
        %326 = vset.pattern.permute.xlu0 1
        %327 = vperm.xlu0 %326, %v236
        %v328 = vpop.permute.xlu0 %327
        %329 = vset.pattern.permute.xlu0 1
        %330 = vperm.xlu0 %329, %v237
        %v331 = vpop.permute.xlu0 %330
        %332 = vset.pattern.permute.xlu0 1
        %333 = vperm.xlu0 %332, %v238
        %v334 = vpop.permute.xlu0 %333
        %335 = vset.pattern.permute.xlu0 1
        %336 = vperm.xlu0 %335, %v239
        %v337 = vpop.permute.xlu0 %336
        %338 = vset.pattern.permute.xlu0 1
        %339 = vperm.xlu0 %338, %v240
        %v340 = vpop.permute.xlu0 %339
        %341 = vset.pattern.permute.xlu0 1
        %342 = vperm.xlu0 %341, %v241
        %v343 = vpop.permute.xlu0 %342
        %344 = vset.pattern.permute.xlu0 1
        %345 = vperm.xlu0 %344, %v242
        %v346 = vpop.permute.xlu0 %345
        %347 = vset.pattern.permute.xlu0 1
        %348 = vperm.xlu0 %347, %v243
        %v349 = vpop.permute.xlu0 %348
        %350 = vset.pattern.permute.xlu0 1
        %351 = vperm.xlu0 %350, %v244
        %v352 = vpop.permute.xlu0 %351
        %353 = vset.pattern.permute.xlu0 1
        %354 = vperm.xlu0 %353, %v245
        %v355 = vpop.permute.xlu0 %354
        %356 = vset.pattern.permute.xlu0 1
        %357 = vperm.xlu0 %356, %v246
        %v358 = vpop.permute.xlu0 %357
        %vm359 = vcmp.eq.s32.totalorder %v313, %v230
        %vm360 = vcmp.eq.s32.totalorder %v316, %v230
        %vm361 = vcmp.eq.s32.totalorder %v319, %v230
        %vm362 = vcmp.eq.s32.totalorder %v322, %v230
        %vm363 = vcmp.eq.s32.totalorder %v325, %v230
        %vm364 = vcmp.eq.s32.totalorder %v328, %v230
        %vm365 = vcmp.eq.s32.totalorder %v331, %v230
        %vm366 = vcmp.eq.s32.totalorder %v334, %v230
        %vm367 = vcmp.eq.s32.totalorder %v337, %v230
        %vm368 = vcmp.eq.s32.totalorder %v340, %v230
        %vm369 = vcmp.eq.s32.totalorder %v343, %v230
        %vm370 = vcmp.eq.s32.totalorder %v346, %v230
        %vm371 = vcmp.eq.s32.totalorder %v349, %v230
        %vm372 = vcmp.eq.s32.totalorder %v352, %v230
        %vm373 = vcmp.eq.s32.totalorder %v355, %v230
        %vm374 = vcmp.eq.s32.totalorder %v358, %v230
        %vm375 = vmor %vm295, %vm359
        %vm376 = vmor %vm296, %vm360
        %vm377 = vmor %vm297, %vm361
        %vm378 = vmor %vm298, %vm362
        %vm379 = vmor %vm299, %vm363
        %vm380 = vmor %vm300, %vm364
        %vm381 = vmor %vm301, %vm365
        %vm382 = vmor %vm302, %vm366
        %vm383 = vmor %vm303, %vm367
        %vm384 = vmor %vm304, %vm368
        %vm385 = vmor %vm305, %vm369
        %vm386 = vmor %vm306, %vm370
        %vm387 = vmor %vm307, %vm371
        %vm388 = vmor %vm308, %vm372
        %vm389 = vmor %vm309, %vm373
        %vm390 = vmor %vm310, %vm374
        %391 = vset.pattern.permute.xlu0 2
        %392 = vperm.xlu0 %391, %v231
        %v393 = vpop.permute.xlu0 %392
        %394 = vset.pattern.permute.xlu0 2
        %395 = vperm.xlu0 %394, %v232
        %v396 = vpop.permute.xlu0 %395
        %397 = vset.pattern.permute.xlu0 2
        %398 = vperm.xlu0 %397, %v233
        %v399 = vpop.permute.xlu0 %398
        %400 = vset.pattern.permute.xlu0 2
        %401 = vperm.xlu0 %400, %v234
        %v402 = vpop.permute.xlu0 %401
        %403 = vset.pattern.permute.xlu0 2
        %404 = vperm.xlu0 %403, %v235
        %v405 = vpop.permute.xlu0 %404
        %406 = vset.pattern.permute.xlu0 2
        %407 = vperm.xlu0 %406, %v236
        %v408 = vpop.permute.xlu0 %407
        %409 = vset.pattern.permute.xlu0 2
        %410 = vperm.xlu0 %409, %v237
        %v411 = vpop.permute.xlu0 %410
        %412 = vset.pattern.permute.xlu0 2
        %413 = vperm.xlu0 %412, %v238
        %v414 = vpop.permute.xlu0 %413
        %415 = vset.pattern.permute.xlu0 2
        %416 = vperm.xlu0 %415, %v239
        %v417 = vpop.permute.xlu0 %416
        %418 = vset.pattern.permute.xlu0 2
        %419 = vperm.xlu0 %418, %v240
        %v420 = vpop.permute.xlu0 %419
        %421 = vset.pattern.permute.xlu0 2
        %422 = vperm.xlu0 %421, %v241
        %v423 = vpop.permute.xlu0 %422
        %424 = vset.pattern.permute.xlu0 2
        %425 = vperm.xlu0 %424, %v242
        %v426 = vpop.permute.xlu0 %425
        %427 = vset.pattern.permute.xlu0 2
        %428 = vperm.xlu0 %427, %v243
        %v429 = vpop.permute.xlu0 %428
        %430 = vset.pattern.permute.xlu0 2
        %431 = vperm.xlu0 %430, %v244
        %v432 = vpop.permute.xlu0 %431
        %433 = vset.pattern.permute.xlu0 2
        %434 = vperm.xlu0 %433, %v245
        %v435 = vpop.permute.xlu0 %434
        %436 = vset.pattern.permute.xlu0 2
        %437 = vperm.xlu0 %436, %v246
        %v438 = vpop.permute.xlu0 %437
        %vm439 = vcmp.eq.s32.totalorder %v393, %v230
        %vm440 = vcmp.eq.s32.totalorder %v396, %v230
        %vm441 = vcmp.eq.s32.totalorder %v399, %v230
        %vm442 = vcmp.eq.s32.totalorder %v402, %v230
        %vm443 = vcmp.eq.s32.totalorder %v405, %v230
        %vm444 = vcmp.eq.s32.totalorder %v408, %v230
        %vm445 = vcmp.eq.s32.totalorder %v411, %v230
        %vm446 = vcmp.eq.s32.totalorder %v414, %v230
        %vm447 = vcmp.eq.s32.totalorder %v417, %v230
        %vm448 = vcmp.eq.s32.totalorder %v420, %v230
        %vm449 = vcmp.eq.s32.totalorder %v423, %v230
        %vm450 = vcmp.eq.s32.totalorder %v426, %v230
        %vm451 = vcmp.eq.s32.totalorder %v429, %v230
        %vm452 = vcmp.eq.s32.totalorder %v432, %v230
        %vm453 = vcmp.eq.s32.totalorder %v435, %v230
        %vm454 = vcmp.eq.s32.totalorder %v438, %v230
        %vm455 = vmor %vm375, %vm439
        %vm456 = vmor %vm376, %vm440
        %vm457 = vmor %vm377, %vm441
        %vm458 = vmor %vm378, %vm442
        %vm459 = vmor %vm379, %vm443
        %vm460 = vmor %vm380, %vm444
        %vm461 = vmor %vm381, %vm445
        %vm462 = vmor %vm382, %vm446
        %vm463 = vmor %vm383, %vm447
        %vm464 = vmor %vm384, %vm448
        %vm465 = vmor %vm385, %vm449
        %vm466 = vmor %vm386, %vm450
        %vm467 = vmor %vm387, %vm451
        %vm468 = vmor %vm388, %vm452
        %vm469 = vmor %vm389, %vm453
        %vm470 = vmor %vm390, %vm454
        %471 = vset.pattern.permute.xlu0 3
        %472 = vperm.xlu0 %471, %v231
        %v473 = vpop.permute.xlu0 %472
        %474 = vset.pattern.permute.xlu0 3
        %475 = vperm.xlu0 %474, %v232
        %v476 = vpop.permute.xlu0 %475
        %477 = vset.pattern.permute.xlu0 3
        %478 = vperm.xlu0 %477, %v233
        %v479 = vpop.permute.xlu0 %478
        %480 = vset.pattern.permute.xlu0 3
        %481 = vperm.xlu0 %480, %v234
        %v482 = vpop.permute.xlu0 %481
        %483 = vset.pattern.permute.xlu0 3
        %484 = vperm.xlu0 %483, %v235
        %v485 = vpop.permute.xlu0 %484
        %486 = vset.pattern.permute.xlu0 3
        %487 = vperm.xlu0 %486, %v236
        %v488 = vpop.permute.xlu0 %487
        %489 = vset.pattern.permute.xlu0 3
        %490 = vperm.xlu0 %489, %v237
        %v491 = vpop.permute.xlu0 %490
        %492 = vset.pattern.permute.xlu0 3
        %493 = vperm.xlu0 %492, %v238
        %v494 = vpop.permute.xlu0 %493
        %495 = vset.pattern.permute.xlu0 3
        %496 = vperm.xlu0 %495, %v239
        %v497 = vpop.permute.xlu0 %496
        %498 = vset.pattern.permute.xlu0 3
        %499 = vperm.xlu0 %498, %v240
        %v500 = vpop.permute.xlu0 %499
        %501 = vset.pattern.permute.xlu0 3
        %502 = vperm.xlu0 %501, %v241
        %v503 = vpop.permute.xlu0 %502
        %504 = vset.pattern.permute.xlu0 3
        %505 = vperm.xlu0 %504, %v242
        %v506 = vpop.permute.xlu0 %505
        %507 = vset.pattern.permute.xlu0 3
        %508 = vperm.xlu0 %507, %v243
        %v509 = vpop.permute.xlu0 %508
        %510 = vset.pattern.permute.xlu0 3
        %511 = vperm.xlu0 %510, %v244
        %v512 = vpop.permute.xlu0 %511
        %513 = vset.pattern.permute.xlu0 3
        %514 = vperm.xlu0 %513, %v245
        %v515 = vpop.permute.xlu0 %514
        %516 = vset.pattern.permute.xlu0 3
        %517 = vperm.xlu0 %516, %v246
        %v518 = vpop.permute.xlu0 %517
        %vm519 = vcmp.eq.s32.totalorder %v473, %v230
        %vm520 = vcmp.eq.s32.totalorder %v476, %v230
        %vm521 = vcmp.eq.s32.totalorder %v479, %v230
        %vm522 = vcmp.eq.s32.totalorder %v482, %v230
        %vm523 = vcmp.eq.s32.totalorder %v485, %v230
        %vm524 = vcmp.eq.s32.totalorder %v488, %v230
        %vm525 = vcmp.eq.s32.totalorder %v491, %v230
        %vm526 = vcmp.eq.s32.totalorder %v494, %v230
        %vm527 = vcmp.eq.s32.totalorder %v497, %v230
        %vm528 = vcmp.eq.s32.totalorder %v500, %v230
        %vm529 = vcmp.eq.s32.totalorder %v503, %v230
        %vm530 = vcmp.eq.s32.totalorder %v506, %v230
        %vm531 = vcmp.eq.s32.totalorder %v509, %v230
        %vm532 = vcmp.eq.s32.totalorder %v512, %v230
        %vm533 = vcmp.eq.s32.totalorder %v515, %v230
        %vm534 = vcmp.eq.s32.totalorder %v518, %v230
        %vm535 = vmor %vm455, %vm519
        %vm536 = vmor %vm456, %vm520
        %vm537 = vmor %vm457, %vm521
        %vm538 = vmor %vm458, %vm522
        %vm539 = vmor %vm459, %vm523
        %vm540 = vmor %vm460, %vm524
        %vm541 = vmor %vm461, %vm525
        %vm542 = vmor %vm462, %vm526
        %vm543 = vmor %vm463, %vm527
        %vm544 = vmor %vm464, %vm528
        %vm545 = vmor %vm465, %vm529
        %vm546 = vmor %vm466, %vm530
        %vm547 = vmor %vm467, %vm531
        %vm548 = vmor %vm468, %vm532
        %vm549 = vmor %vm469, %vm533
        %vm550 = vmor %vm470, %vm534
        %v551 = vsel %vm535, 1, 0
        %v552 = vsel %vm536, 1, 0
        %v553 = vsel %vm537, 1, 0
        %v554 = vsel %vm538, 1, 0
        %v555 = vsel %vm539, 1, 0
        %v556 = vsel %vm540, 1, 0
        %v557 = vsel %vm541, 1, 0
        %v558 = vsel %vm542, 1, 0
        %v559 = vsel %vm543, 1, 0
        %v560 = vsel %vm544, 1, 0
        %v561 = vsel %vm545, 1, 0
        %v562 = vsel %vm546, 1, 0
        %v563 = vsel %vm547, 1, 0
        %v564 = vsel %vm548, 1, 0
        %v565 = vsel %vm549, 1, 0
        %v566 = vsel %vm550, 1, 0
        %v567 = vcvt.s32.f32 %v551
        %v568 = vcvt.s32.f32 %v552
        %v569 = vcvt.s32.f32 %v553
        %v570 = vcvt.s32.f32 %v554
        %v571 = vcvt.s32.f32 %v555
        %v572 = vcvt.s32.f32 %v556
        %v573 = vcvt.s32.f32 %v557
        %v574 = vcvt.s32.f32 %v558
        %v575 = vcvt.s32.f32 %v559
        %v576 = vcvt.s32.f32 %v560
        %v577 = vcvt.s32.f32 %v561
        %v578 = vcvt.s32.f32 %v562
        %v579 = vcvt.s32.f32 %v563
        %v580 = vcvt.s32.f32 %v564
        %v581 = vcvt.s32.f32 %v565
        %v582 = vcvt.s32.f32 %v566
        %v583 = vpack.c.bf16 %v568, %v567
        %v584 = vpack.c.bf16 %v570, %v569
        %v585 = vpack.c.bf16 %v572, %v571
        %v586 = vpack.c.bf16 %v574, %v573
        %v587 = vpack.c.bf16 %v576, %v575
        %v588 = vpack.c.bf16 %v578, %v577
        %v589 = vpack.c.bf16 %v580, %v579
        %v590 = vpack.c.bf16 %v582, %v581
        %v591 = vld [vmem:[%s1] sm:$0xff]
        %v592 = vld [vmem:[%s1 + $0x8] sm:$0xff]
        %v593 = vld [vmem:[%s1 + $0x10] sm:$0xff]
        %v594 = vld [vmem:[%s1 + $0x18] sm:$0xff]
        %v595 = vld [vmem:[%s1 + $0x20] sm:$0xff]
        %v596 = vld [vmem:[%s1 + $0x28] sm:$0xff]
        %v597 = vld [vmem:[%s1 + $0x30] sm:$0xff]
        %v598 = vld [vmem:[%s1 + $0x38] sm:$0xff]
        %v599 = vld [vmem:[%s1 + $0x40] sm:$0xff]
        %v600 = vld [vmem:[%s1 + $0x48] sm:$0xff]
        %v601 = vld [vmem:[%s1 + $0x50] sm:$0xff]
        %v602 = vld [vmem:[%s1 + $0x58] sm:$0xff]
        %v603 = vld [vmem:[%s1 + $0x60] sm:$0xff]
        %v604 = vld [vmem:[%s1 + $0x68] sm:$0xff]
        %v605 = vld [vmem:[%s1 + $0x70] sm:$0xff]
        %v606 = vld [vmem:[%s1 + $0x78] sm:$0xff]
        %v623 = vunpack.c.l.b16 %v591
        %v624 = vunpack.c.h.b16 %v591
        %v625 = vunpack.c.l.b16 %v592
        %v626 = vunpack.c.h.b16 %v592
        %v627 = vunpack.c.l.b16 %v593
        %v628 = vunpack.c.h.b16 %v593
        %v629 = vunpack.c.l.b16 %v594
        %v630 = vunpack.c.h.b16 %v594
        %v631 = vunpack.c.l.b16 %v595
        %v632 = vunpack.c.h.b16 %v595
        %v633 = vunpack.c.l.b16 %v596
        %v634 = vunpack.c.h.b16 %v596
        %v635 = vunpack.c.l.b16 %v597
        %v636 = vunpack.c.h.b16 %v597
        %v637 = vunpack.c.l.b16 %v598
        %v638 = vunpack.c.h.b16 %v598
        %v639 = vunpack.c.l.b16 %v599
        %v640 = vunpack.c.h.b16 %v599
        %v641 = vunpack.c.l.b16 %v600
        %v642 = vunpack.c.h.b16 %v600
        %v643 = vunpack.c.l.b16 %v601
        %v644 = vunpack.c.h.b16 %v601
        %v645 = vunpack.c.l.b16 %v602
        %v646 = vunpack.c.h.b16 %v602
        %v647 = vunpack.c.l.b16 %v603
        %v648 = vunpack.c.h.b16 %v603
        %v649 = vunpack.c.l.b16 %v604
        %v650 = vunpack.c.h.b16 %v604
        %v651 = vunpack.c.l.b16 %v605
        %v652 = vunpack.c.h.b16 %v605
        %v653 = vunpack.c.l.b16 %v606
        %v654 = vunpack.c.h.b16 %v606
        %v655 = vpack.c.b16 %v625, %v623
        %v656 = vpack.c.b16 %v626, %v624
        %v657 = vpack.c.b16 %v629, %v627
        %v658 = vpack.c.b16 %v630, %v628
        %v659 = vpack.c.b16 %v633, %v631
        %v660 = vpack.c.b16 %v634, %v632
        %v661 = vpack.c.b16 %v637, %v635
        %v662 = vpack.c.b16 %v638, %v636
        %v663 = vpack.c.b16 %v641, %v639
        %v664 = vpack.c.b16 %v642, %v640
        %v665 = vpack.c.b16 %v645, %v643
        %v666 = vpack.c.b16 %v646, %v644
        %v667 = vpack.c.b16 %v649, %v647
        %v668 = vpack.c.b16 %v650, %v648
        %v669 = vpack.c.b16 %v653, %v651
        %v670 = vpack.c.b16 %v654, %v652
        %687 = vmatprep.subr.bf16.mxu0 %v656
        %688 = vmatpush1.bf16.msra.mxu0 %v655
        %689 = vmatprep.subr.bf16.mxu0 %v658
        %690 = vmatpush1.bf16.msra.mxu0 %v657
        %691 = vmatprep.subr.bf16.mxu0 %v660
        %692 = vmatpush1.bf16.msra.mxu0 %v659
        %693 = vmatprep.subr.bf16.mxu0 %v662
        %694 = vmatpush1.bf16.msra.mxu0 %v661
        %695 = vmatprep.subr.bf16.mxu0 %v664
        %696 = vmatpush1.bf16.msra.mxu0 %v663
        %697 = vmatprep.subr.bf16.mxu0 %v666
        %698 = vmatpush1.bf16.msra.mxu0 %v665
        %699 = vmatprep.subr.bf16.mxu0 %v668
        %700 = vmatpush1.bf16.msra.mxu0 %v667
        %701 = vmatprep.subr.bf16.mxu0 %v670
        %702 = vmatpush1.bf16.msra.mxu0 %v669
        %703 = vmatprep.subr.bf16.mxu0 0
        %704 = vmatpush1.bf16.msra.mxu0 0
        %705 = vmatprep.subr.bf16.mxu0 0
        %706 = vmatpush1.bf16.msra.mxu0 0
        %707 = vmatprep.subr.bf16.mxu0 0
        %708 = vmatpush1.bf16.msra.mxu0 0
        %709 = vmatprep.subr.bf16.mxu0 0
        %710 = vmatpush1.bf16.msra.mxu0 0
        %711 = vmatprep.subr.bf16.mxu0 0
        %712 = vmatpush1.bf16.msra.mxu0 0
        %713 = vmatprep.subr.bf16.mxu0 0
        %714 = vmatpush1.bf16.msra.mxu0 0
        %715 = vmatprep.subr.bf16.mxu0 0
        %716 = vmatpush1.bf16.msra.mxu0 0
        %717 = vmatprep.subr.bf16.mxu0 0
        %718 = vmatpush1.bf16.msra.mxu0 0
        %719 = vmatprep.mubr.bf16.mxu0 0
        %720 = vmatmul.mubr.bf16.gmra.mrb[0].mxu0 %v583
        %v721 = vpop.f32.mrb[0].mxu0
        %v722 = vadd.f32 0.0, %v721
        %v723 = vpop.f32.mrb[0].mxu0
        %v724 = vadd.f32 0.0, %v723
        %v725 = vpop.f32.mrb[0].mxu0
        %v726 = vadd.f32 0.0, %v725
        %v727 = vpop.f32.mrb[0].mxu0
        %v728 = vadd.f32 0.0, %v727
        %729 = vmatprep.mubr.bf16.mxu0 0
        %730 = vmatmul.mubr.bf16.gmra.mrb[0].mxu0 %v584
        %v731 = vpop.f32.mrb[0].mxu0
        %v732 = vadd.f32 0.0, %v731
        %v733 = vpop.f32.mrb[0].mxu0
        %v734 = vadd.f32 0.0, %v733
        %v735 = vpop.f32.mrb[0].mxu0
        %v736 = vadd.f32 0.0, %v735
        %v737 = vpop.f32.mrb[0].mxu0
        %v738 = vadd.f32 0.0, %v737
        %739 = vmatprep.mubr.bf16.mxu0 0
        %740 = vmatmul.mubr.bf16.gmra.mrb[0].mxu0 %v585
        %v741 = vpop.f32.mrb[0].mxu0
        %v742 = vadd.f32 0.0, %v741
        %v743 = vpop.f32.mrb[0].mxu0
        %v744 = vadd.f32 0.0, %v743
        %v745 = vpop.f32.mrb[0].mxu0
        %v746 = vadd.f32 0.0, %v745
        %v747 = vpop.f32.mrb[0].mxu0
        %v748 = vadd.f32 0.0, %v747
        %749 = vmatprep.mubr.bf16.mxu0 0
        %750 = vmatmul.mubr.bf16.gmra.mrb[0].mxu0 %v586
        %v751 = vpop.f32.mrb[0].mxu0
        %v752 = vadd.f32 0.0, %v751
        %v753 = vpop.f32.mrb[0].mxu0
        %v754 = vadd.f32 0.0, %v753
        %v755 = vpop.f32.mrb[0].mxu0
        %v756 = vadd.f32 0.0, %v755
        %v757 = vpop.f32.mrb[0].mxu0
        %v758 = vadd.f32 0.0, %v757
        %759 = vmatprep.mubr.bf16.mxu0 0
        %760 = vmatmul.mubr.bf16.gmra.mrb[0].mxu0 %v587
        %v761 = vpop.f32.mrb[0].mxu0
        %v762 = vadd.f32 0.0, %v761
        %v763 = vpop.f32.mrb[0].mxu0
        %v764 = vadd.f32 0.0, %v763
        %v765 = vpop.f32.mrb[0].mxu0
        %v766 = vadd.f32 0.0, %v765
        %v767 = vpop.f32.mrb[0].mxu0
        %v768 = vadd.f32 0.0, %v767
        %769 = vmatprep.mubr.bf16.mxu0 0
        %770 = vmatmul.mubr.bf16.gmra.mrb[0].mxu0 %v588
        %v771 = vpop.f32.mrb[0].mxu0
        %v772 = vadd.f32 0.0, %v771
        %v773 = vpop.f32.mrb[0].mxu0
        %v774 = vadd.f32 0.0, %v773
        %v775 = vpop.f32.mrb[0].mxu0
        %v776 = vadd.f32 0.0, %v775
        %v777 = vpop.f32.mrb[0].mxu0
        %v778 = vadd.f32 0.0, %v777
        %779 = vmatprep.mubr.bf16.mxu0 0
        %780 = vmatmul.mubr.bf16.gmra.mrb[0].mxu0 %v589
        %v781 = vpop.f32.mrb[0].mxu0
        %v782 = vadd.f32 0.0, %v781
        %v783 = vpop.f32.mrb[0].mxu0
        %v784 = vadd.f32 0.0, %v783
        %v785 = vpop.f32.mrb[0].mxu0
        %v786 = vadd.f32 0.0, %v785
        %v787 = vpop.f32.mrb[0].mxu0
        %v788 = vadd.f32 0.0, %v787
        %789 = vmatprep.mubr.bf16.mxu0 0
        %790 = vmatmul.mubr.bf16.gmra.mrb[0].mxu0 %v590
        %v791 = vpop.f32.mrb[0].mxu0
        %v792 = vadd.f32 0.0, %v791
        %v793 = vpop.f32.mrb[0].mxu0
        %v794 = vadd.f32 0.0, %v793
        %v795 = vpop.f32.mrb[0].mxu0
        %v796 = vadd.f32 0.0, %v795
        %v797 = vpop.f32.mrb[0].mxu0
        %v798 = vadd.f32 0.0, %v797
        %799 = vdwg.mxu0
        %v800 = vmax.f32 %v722, %v726
        %v801 = vrot.slane %v800, 4
        %v802 = vmax.f32 %v800, %v801
        %v803 = vrot.slane %v802, 2
        %v804 = vmax.f32 %v802, %v803
        %v805 = vrot.slane %v804, 1
        %v806 = vmax.f32 %v804, %v805
        %vm807 = vcmask 523264
        %v808 = vsel %vm807, %v724, -inf
        %v809 = vsel %vm807, %v728, -inf
        %v810 = vmax.f32 %v808, %v809
        %v811 = vrot.slane %v810, 4
        %v812 = vmax.f32 %v810, %v811
        %v813 = vrot.slane %v812, 2
        %v814 = vmax.f32 %v812, %v813
        %v815 = vrot.slane %v814, 1
        %v816 = vmax.f32 %v814, %v815
        %v817 = vmax.f32 %v732, %v736
        %v818 = vrot.slane %v817, 4
        %v819 = vmax.f32 %v817, %v818
        %v820 = vrot.slane %v819, 2
        %v821 = vmax.f32 %v819, %v820
        %v822 = vrot.slane %v821, 1
        %v823 = vmax.f32 %v821, %v822
        %v824 = vsel %vm807, %v734, -inf
        %v825 = vsel %vm807, %v738, -inf
        %v826 = vmax.f32 %v824, %v825
        %v827 = vrot.slane %v826, 4
        %v828 = vmax.f32 %v826, %v827
        %v829 = vrot.slane %v828, 2
        %v830 = vmax.f32 %v828, %v829
        %v831 = vrot.slane %v830, 1
        %v832 = vmax.f32 %v830, %v831
        %v833 = vmax.f32 %v742, %v746
        %v834 = vrot.slane %v833, 4
        %v835 = vmax.f32 %v833, %v834
        %v836 = vrot.slane %v835, 2
        %v837 = vmax.f32 %v835, %v836
        %v838 = vrot.slane %v837, 1
        %v839 = vmax.f32 %v837, %v838
        %v840 = vsel %vm807, %v744, -inf
        %v841 = vsel %vm807, %v748, -inf
        %v842 = vmax.f32 %v840, %v841
        %v843 = vrot.slane %v842, 4
        %v844 = vmax.f32 %v842, %v843
        %v845 = vrot.slane %v844, 2
        %v846 = vmax.f32 %v844, %v845
        %v847 = vrot.slane %v846, 1
        %v848 = vmax.f32 %v846, %v847
        %v849 = vmax.f32 %v752, %v756
        %v850 = vrot.slane %v849, 4
        %v851 = vmax.f32 %v849, %v850
        %v852 = vrot.slane %v851, 2
        %v853 = vmax.f32 %v851, %v852
        %v854 = vrot.slane %v853, 1
        %v855 = vmax.f32 %v853, %v854
        %v856 = vsel %vm807, %v754, -inf
        %v857 = vsel %vm807, %v758, -inf
        %v858 = vmax.f32 %v856, %v857
        %v859 = vrot.slane %v858, 4
        %v860 = vmax.f32 %v858, %v859
        %v861 = vrot.slane %v860, 2
        %v862 = vmax.f32 %v860, %v861
        %v863 = vrot.slane %v862, 1
        %v864 = vmax.f32 %v862, %v863
        %v865 = vmax.f32 %v762, %v766
        %v866 = vrot.slane %v865, 4
        %v867 = vmax.f32 %v865, %v866
        %v868 = vrot.slane %v867, 2
        %v869 = vmax.f32 %v867, %v868
        %v870 = vrot.slane %v869, 1
        %v871 = vmax.f32 %v869, %v870
        %v872 = vsel %vm807, %v764, -inf
        %v873 = vsel %vm807, %v768, -inf
        %v874 = vmax.f32 %v872, %v873
        %v875 = vrot.slane %v874, 4
        %v876 = vmax.f32 %v874, %v875
        %v877 = vrot.slane %v876, 2
        %v878 = vmax.f32 %v876, %v877
        %v879 = vrot.slane %v878, 1
        %v880 = vmax.f32 %v878, %v879
        %v881 = vmax.f32 %v772, %v776
        %v882 = vrot.slane %v881, 4
        %v883 = vmax.f32 %v881, %v882
        %v884 = vrot.slane %v883, 2
        %v885 = vmax.f32 %v883, %v884
        %v886 = vrot.slane %v885, 1
        %v887 = vmax.f32 %v885, %v886
        %v888 = vsel %vm807, %v774, -inf
        %v889 = vsel %vm807, %v778, -inf
        %v890 = vmax.f32 %v888, %v889
        %v891 = vrot.slane %v890, 4
        %v892 = vmax.f32 %v890, %v891
        %v893 = vrot.slane %v892, 2
        %v894 = vmax.f32 %v892, %v893
        %v895 = vrot.slane %v894, 1
        %v896 = vmax.f32 %v894, %v895
        %v897 = vmax.f32 %v782, %v786
        %v898 = vrot.slane %v897, 4
        %v899 = vmax.f32 %v897, %v898
        %v900 = vrot.slane %v899, 2
        %v901 = vmax.f32 %v899, %v900
        %v902 = vrot.slane %v901, 1
        %v903 = vmax.f32 %v901, %v902
        %v904 = vsel %vm807, %v784, -inf
        %v905 = vsel %vm807, %v788, -inf
        %v906 = vmax.f32 %v904, %v905
        %v907 = vrot.slane %v906, 4
        %v908 = vmax.f32 %v906, %v907
        %v909 = vrot.slane %v908, 2
        %v910 = vmax.f32 %v908, %v909
        %v911 = vrot.slane %v910, 1
        %v912 = vmax.f32 %v910, %v911
        %v913 = vmax.f32 %v792, %v796
        %v914 = vrot.slane %v913, 4
        %v915 = vmax.f32 %v913, %v914
        %v916 = vrot.slane %v915, 2
        %v917 = vmax.f32 %v915, %v916
        %v918 = vrot.slane %v917, 1
        %v919 = vmax.f32 %v917, %v918
        %v920 = vsel %vm807, %v794, -inf
        %v921 = vsel %vm807, %v798, -inf
        %v922 = vmax.f32 %v920, %v921
        %v923 = vrot.slane %v922, 4
        %v924 = vmax.f32 %v922, %v923
        %v925 = vrot.slane %v924, 2
        %v926 = vmax.f32 %v924, %v925
        %v927 = vrot.slane %v926, 1
        %v928 = vmax.f32 %v926, %v927
        %v929 = vld [vmem:[%s2] sm:$0x3]
        %v931 = vlaneseq
        %v932 = vshrl.u32 %v931, 7
        %v933 = vsub.s32 0, %v932
        %v934 = vrot.slane %v929, %v933
        %v935 = vlaneseq
        %v936 = vshrl.u32 %v935, 7
        %v937 = vsub.s32 1, %v936
        %v938 = vrot.slane %v929, %v937
        %v941 = vadd.f32 %v806, %v934
        %v942 = vadd.f32 %v816, %v938
        %v943 = vadd.f32 %v823, %v934
        %v944 = vadd.f32 %v832, %v938
        %v945 = vadd.f32 %v839, %v934
        %v946 = vadd.f32 %v848, %v938
        %v947 = vadd.f32 %v855, %v934
        %v948 = vadd.f32 %v864, %v938
        %v949 = vadd.f32 %v871, %v934
        %v950 = vadd.f32 %v880, %v938
        %v951 = vadd.f32 %v887, %v934
        %v952 = vadd.f32 %v896, %v938
        %v953 = vadd.f32 %v903, %v934
        %v954 = vadd.f32 %v912, %v938
        %v955 = vadd.f32 %v919, %v934
        %v956 = vadd.f32 %v928, %v938
        %v957 = vmax.f32 %v941, 0.0
        %v958 = vmax.f32 %v942, 0.0
        %v959 = vmax.f32 %v943, 0.0
        %v960 = vmax.f32 %v944, 0.0
        %v961 = vmax.f32 %v945, 0.0
        %v962 = vmax.f32 %v946, 0.0
        %v963 = vmax.f32 %v947, 0.0
        %v964 = vmax.f32 %v948, 0.0
        %v965 = vmax.f32 %v949, 0.0
        %v966 = vmax.f32 %v950, 0.0
        %v967 = vmax.f32 %v951, 0.0
        %v968 = vmax.f32 %v952, 0.0
        %v969 = vmax.f32 %v953, 0.0
        %v970 = vmax.f32 %v954, 0.0
        %v971 = vmax.f32 %v955, 0.0
        %v972 = vmax.f32 %v956, 0.0
        %v973 = vld [vmem:[%s3] sm:$0xff]
        %v974 = vld [vmem:[%s3 + $0x8] sm:$0xff]
        %v975 = vld [vmem:[%s3 + $0x10] sm:$0xff]
        %v976 = vld [vmem:[%s3 + $0x18] sm:$0xff]
        %v977 = vld [vmem:[%s3 + $0x20] sm:$0xff]
        %v978 = vld [vmem:[%s3 + $0x28] sm:$0xff]
        %v979 = vld [vmem:[%s3 + $0x30] sm:$0xff]
        %v980 = vld [vmem:[%s3 + $0x38] sm:$0xff]
        %v981 = vld [vmem:[%s3 + $0x40] sm:$0xff]
        %v982 = vld [vmem:[%s3 + $0x48] sm:$0xff]
        %v983 = vld [vmem:[%s3 + $0x50] sm:$0xff]
        %v984 = vld [vmem:[%s3 + $0x58] sm:$0xff]
        %v985 = vld [vmem:[%s3 + $0x60] sm:$0xff]
        %v986 = vld [vmem:[%s3 + $0x68] sm:$0xff]
        %v987 = vld [vmem:[%s3 + $0x70] sm:$0xff]
        %v988 = vld [vmem:[%s3 + $0x78] sm:$0xff]
        %v989 = vld [vmem:[%s3 + $0x80] sm:$0xff]
        %v990 = vld [vmem:[%s3 + $0x88] sm:$0xff]
        %v991 = vld [vmem:[%s3 + $0x90] sm:$0xff]
        %v992 = vld [vmem:[%s3 + $0x98] sm:$0xff]
        %v993 = vld [vmem:[%s3 + $0xa0] sm:$0xff]
        %v994 = vld [vmem:[%s3 + $0xa8] sm:$0xff]
        %v995 = vld [vmem:[%s3 + $0xb0] sm:$0xff]
        %v996 = vld [vmem:[%s3 + $0xb8] sm:$0xff]
        %v997 = vld [vmem:[%s4] sm:$0x1]
        %v999 = vlaneseq
        %v1000 = vshrl.u32 %v999, 7
        %v1001 = vsub.s32 0, %v1000
        %v1002 = vrot.slane %v997, %v1001
        %v1020 = vrot.slane %v959, 7
        %vm1021 = vcmask 1041409
        %v1022 = vsel %vm1021, %v1020, %v957
        %v1023 = vrot.slane %v961, 6
        %vm1024 = vcmask 1042434
        %v1025 = vsel %vm1024, %v1023, %v1022
        %v1026 = vrot.slane %v963, 5
        %vm1027 = vcmask 1043459
        %v1028 = vsel %vm1027, %v1026, %v1025
        %v1029 = vrot.slane %v965, 4
        %vm1030 = vcmask 1044484
        %v1031 = vsel %vm1030, %v1029, %v1028
        %v1032 = vrot.slane %v967, 3
        %vm1033 = vcmask 1045509
        %v1034 = vsel %vm1033, %v1032, %v1031
        %v1035 = vrot.slane %v969, 2
        %vm1036 = vcmask 1046534
        %v1037 = vsel %vm1036, %v1035, %v1034
        %v1038 = vrot.slane %v971, 1
        %vm1039 = vcmask 1047559
        %v1040 = vsel %vm1039, %v1038, %v1037
        %v1041 = vrot.slane %v960, 7
        %v1042 = vsel %vm1021, %v1041, %v958
        %v1043 = vrot.slane %v962, 6
        %v1044 = vsel %vm1024, %v1043, %v1042
        %v1045 = vrot.slane %v964, 5
        %v1046 = vsel %vm1027, %v1045, %v1044
        %v1047 = vrot.slane %v966, 4
        %v1048 = vsel %vm1030, %v1047, %v1046
        %v1049 = vrot.slane %v968, 3
        %v1050 = vsel %vm1033, %v1049, %v1048
        %v1051 = vrot.slane %v970, 2
        %v1052 = vsel %vm1036, %v1051, %v1050
        %v1053 = vrot.slane %v972, 1
        %v1054 = vsel %vm1039, %v1053, %v1052
        %v1056 = vsel %vm807, %v1054, 0
        %1058 = vmatprep.subr.mxu0 0.0
        %1059 = vmatpush1.msra.mxu0 %v973
        %1060 = vmatprep.subr.mxu0 0.0
        %1061 = vmatpush1.msra.mxu0 %v974
        %1062 = vmatprep.subr.mxu0 0.0
        %1063 = vmatpush1.msra.mxu0 %v975
        %1064 = vmatprep.subr.mxu0 0.0
        %1065 = vmatpush1.msra.mxu0 %v976
        %1066 = vmatprep.subr.mxu0 0.0
        %1067 = vmatpush1.msra.mxu0 %v977
        %1068 = vmatprep.subr.mxu0 0.0
        %1069 = vmatpush1.msra.mxu0 %v978
        %1070 = vmatprep.subr.mxu0 0.0
        %1071 = vmatpush1.msra.mxu0 %v979
        %1072 = vmatprep.subr.mxu0 0.0
        %1073 = vmatpush1.msra.mxu0 %v980
        %1074 = vmatprep.subr.mxu0 0.0
        %1075 = vmatpush1.msra.mxu0 %v981
        %1076 = vmatprep.subr.mxu0 0.0
        %1077 = vmatpush1.msra.mxu0 %v982
        %1078 = vmatprep.subr.mxu0 0.0
        %1079 = vmatpush1.msra.mxu0 %v983
        %1080 = vmatprep.subr.mxu0 0.0
        %1081 = vmatpush1.msra.mxu0 %v984
        %1082 = vmatprep.subr.mxu0 0.0
        %1083 = vmatpush1.msra.mxu0 %v985
        %1084 = vmatprep.subr.mxu0 0.0
        %1085 = vmatpush1.msra.mxu0 %v986
        %1086 = vmatprep.subr.mxu0 0.0
        %1087 = vmatpush1.msra.mxu0 %v987
        %1088 = vmatprep.subr.mxu0 0.0
        %1089 = vmatpush1.msra.mxu0 %v988
        %1090 = vmatprep.subr.mxu0 0.0
        %1091 = vmatpush1.msra.mxu0 %v989
        %1092 = vmatprep.subr.mxu0 0.0
        %1093 = vmatpush1.msra.mxu0 %v990
        %1094 = vmatprep.subr.mxu0 0.0
        %1095 = vmatpush1.msra.mxu0 %v991
        %1096 = vmatprep.subr.mxu0 0.0
        %1097 = vmatpush1.msra.mxu0 %v992
        %1098 = vmatprep.subr.mxu0 0.0
        %1099 = vmatpush1.msra.mxu0 %v993
        %1100 = vmatprep.subr.mxu0 0.0
        %1101 = vmatpush1.msra.mxu0 %v994
        %1102 = vmatprep.subr.mxu0 0.0
        %1103 = vmatpush1.msra.mxu0 %v995
        %1104 = vmatprep.subr.mxu0 0.0
        %1105 = vmatpush1.msra.mxu0 %v996
        %1106 = vmatprep.subr.mxu0 0.0
        %1107 = vmatpush1.msra.mxu0 0.0
        %1108 = vmatprep.subr.mxu0 0.0
        %1109 = vmatpush1.msra.mxu0 0.0
        %1110 = vmatprep.subr.mxu0 0.0
        %1111 = vmatpush1.msra.mxu0 0.0
        %1112 = vmatprep.subr.mxu0 0.0
        %1113 = vmatpush1.msra.mxu0 0.0
        %1114 = vmatprep.subr.mxu0 0.0
        %1115 = vmatpush1.msra.mxu0 0.0
        %1116 = vmatprep.subr.mxu0 0.0
        %1117 = vmatpush1.msra.mxu0 0.0
        %1118 = vmatprep.subr.mxu0 0.0
        %1119 = vmatpush1.msra.mxu0 0.0
        %1120 = vmatprep.subr.mxu0 0.0
        %1121 = vmatpush1.msra.mxu0 0.0
        %1122 = vmatprep.mubr.f32.mxu0 %v1056
        %1123 = vmatmul.mubr.f32.gmra.mrb[0].mxu0 %v1040
        %v1124 = vpop.f32.mrb[0].mxu0
        %v1125 = vadd.f32 %v1002, %v1124
        %v1126 = vpop.f32.mrb[0].mxu0
        %1127 = vdwg.mxu0
        %1128 = vst [vmem:[%s220] sm:$0xff] %v1125
        %s1129 = sand.u32 %s137, 1
        %s1130 = scalar_lea.sflag [#allocation3], %s1129
        %s1131 = sand.u32 %s137, 1
        %s1132 = smul.addr %s1131, 8
        %s1133 = scalar_lea.vmem [#allocation2], %s1132
        // Predicated region
        $region41: #{tpu_custom_call.1} parent=39 // pred_check
          %p1134 = pneg %p147
        $region42: #{tpu_custom_call.1} parent=39 // pred_check_branch
          %1136 = sbr.rel (%p1134) target = $region44
        $region43: #{tpu_custom_call.1} parent=39 // pred_region
          %s1138 = ssub.s32 128, 128
          %1139 = vsyncadd %s1130, %s1138
          %s1140 = smul.addr %s19, 128
          %s1141 = scalar_lea.hbm %s5, %s1140
          %s1143 = sshll.u32 %s1133, 4
          %s1144 = int_to_ptr.vmem [resolvable:$true] %s1143
          %1146 = dma.vmem_to_hbm [thread:$0]  %s1144, 128, %s1141, %s1130
        $region44: #{tpu_custom_call.1} parent=39 // pred_fallthru
          _
      $region40: #{tpu_custom_call.1} parent=5 // pred_fallthru
        _
      %p1147 = scmp.le.s32.totalorder 2, %s14
      // Predicated region
      $region45: #{tpu_custom_call.1} parent=5 // pred_check
        %p1148 = pneg %p1147
      $region46: #{tpu_custom_call.1} parent=5 // pred_check_branch
        %1150 = sbr.rel (%p1148) target = $region48
      $region47: #{tpu_custom_call.1} parent=5 // pred_region
        %s1151 = ssub.s32 %s14, 2
        // Predicated region
        $region49: #{tpu_custom_call.1} parent=47 // pred_check
          %p1152 = pneg %p153
        $region50: #{tpu_custom_call.1} parent=47 // pred_check_branch
          %1154 = sbr.rel (%p1152) target = $region52
        $region51: #{tpu_custom_call.1} parent=47 // pred_region
          %s1155 = sand.u32 %s138, 1
          %s1156 = scalar_lea.sflag [#allocation3], %s1155
          %s1157 = sand.u32 %s138, 1
          %s1158 = smul.addr %s1157, 8
          %s1159 = scalar_lea.vmem [#allocation2], %s1158
          %1160 = dma.done %s1156, 128
        $region52: #{tpu_custom_call.1} parent=47 // pred_fallthru
          _
      $region48: #{tpu_custom_call.1} parent=5 // pred_fallthru
        _
    $region6: #{tpu_custom_call.1} parent=1 // loop_footer
      %s18 = sadd.s32 1, %s14
    $region7: #{tpu_custom_call.1} parent=1 // loop_footer_branch
      %13 = sbr.rel target = $region3
    $region8: #{tpu_custom_call.1} parent=1 // loop_exit
      _
    %1161 = vsyncpa [#allocation3], 1
    %s1162 = scalar_lea.sflag [#allocation3], 1
    %1163 = vsyncpa %s1162, 1

</llo_original>
